<compile_context>
chip_gen: v7x
topology: tpu7x:2x2x1
jax: 0.10.0
libtpu: 0.0.40
codegen_flags: <defaults>
</compile_context>

<pallas_src>
import math

import jax
import jax.numpy as jnp
from jax import lax
from jax.experimental import pallas as pl
from jax.experimental.pallas import tpu as pltpu


def _round_up(x, m):
    return (x + m - 1) // m * m


def _adapter_linear_kernel(x_ref, w_ref, at_ref, bt_ref, bias_ref, o_ref,
                           acc_ref, h_ref):
    """Fused base-GEMM + LoRA adapter + bias.

    Grid: (i over row tiles, j over out_features tiles, k over in_features tiles)
      x_ref:    (tm, tk)       x tile for (i, k)
      w_ref:    (tn, tk)       weight tile for (j, k)   (W stored (out, in))
      at_ref:   (tk, rank)     lora_a^T tile for k
      bt_ref:   (rank, tn)     scaling-folded lora_b^T tile for j
      bias_ref: (1, tn)        bias tile for j
      o_ref:    (tm, tn)       output tile for (i, j)
      acc_ref:  (tm, tn) f32   base-GEMM accumulator (carried over k)
      h_ref:    (tm, rank) f32 x @ A^T accumulator (carried over j and k)
    """
    j = pl.program_id(1)
    k = pl.program_id(2)

    @pl.when(k == 0)
    def _():
        acc_ref[...] = jnp.zeros_like(acc_ref)

    x = x_ref[...]

    # Base projection: acc += x @ W_tile^T ("NT" matmul, contract on in_features).
    acc_ref[...] += lax.dot_general(
        x, w_ref[...],
        dimension_numbers=(((1,), (1,)), ((), ())),
        preferred_element_type=jnp.float32)

    # h = x @ A^T is independent of j: compute it only for the first
    # out_features tile of each row block and keep it resident in VMEM.
    @pl.when((j == 0) & (k == 0))
    def _():
        h_ref[...] = jnp.zeros_like(h_ref)

    @pl.when(j == 0)
    def _():
        h_ref[...] += jnp.dot(x, at_ref[...], preferred_element_type=jnp.float32)

    # Epilogue on the last k step: low-rank expansion + bias, f32 add, one cast.
    @pl.when(k == pl.num_programs(2) - 1)
    def _():
        h = h_ref[...].astype(bt_ref.dtype)
        adapter = jnp.dot(h, bt_ref[...], preferred_element_type=jnp.float32)
        out = acc_ref[...] + adapter + bias_ref[...].astype(jnp.float32)
        o_ref[...] = out.astype(o_ref.dtype)


def _lane_tile(dim, pref=512, full_cap=2048):
    """Lane-dense tile (multiple of 128 or full width) and padded extent."""
    if dim <= pref:
        return dim, dim                              # full-width block: legal
    if dim % 128 == 0:
        for t in range(pref, 255, -128):             # prefer big clean divisors
            if dim % t == 0:
                return t, dim
    if dim <= full_cap:
        return dim, dim                              # full width, no padding
    return pref, _round_up(dim, pref)                # pad instead of 128-tiles


def _vmem_bytes(tm, tn, tk, rank, itemsize):
    """Lane/sublane-padding-aware VMEM estimate for one grid step."""
    rank_l = _round_up(rank, 128)
    rank_s = _round_up(rank, 8)
    dbuf = 2
    b = dbuf * tm * tk * itemsize                    # x stream
    b += dbuf * tn * tk * itemsize                   # W stream
    b += dbuf * tk * rank_l * itemsize               # A^T stream (lane padded)
    b += dbuf * rank_s * tn * itemsize               # B^T stream
    b += dbuf * 8 * tn * itemsize                    # bias stream
    b += dbuf * tm * tn * itemsize                   # out stream
    b += tm * tn * 4                                 # f32 base accumulator
    b += tm * rank_l * 4                             # f32 h scratch
    b += 2 * tm * tn * 4                             # epilogue f32 intermediates
    return b


def adapter_linear_forward(hidden_states, weight, bias, lora_a, lora_b, *,
                           scaling, tile_m=None, tile_n=None, tile_k=None):
    """AdapterLinear.forward with use_lora=True (eval mode), fully fused.

    hidden_states: (..., in_features); weight: (out_features, in_features);
    bias: (out_features,) or None; lora_a: (rank, in); lora_b: (out, rank).
    """
    # TODO(synk): training-mode dropout (stateful PRNG mask) not implemented;
    # nn.Dropout is the identity in eval mode.
    lead = hidden_states.shape[:-1]
    in_features = hidden_states.shape[-1]
    out_features, rank = lora_b.shape
    assert weight.shape == (out_features, in_features)
    assert lora_a.shape == (rank, in_features)

    dtype = hidden_states.dtype
    itemsize = jnp.dtype(dtype).itemsize
    sublane = max(8, 32 // itemsize)                 # 8 (f32) / 16 (bf16) / 32 (i8)

    x2d = hidden_states.reshape(-1, in_features)
    M = x2d.shape[0]

    # Per-generation VMEM budget (64 MiB on v7x, 128 MiB on v5e/v6e).
    try:
        vmem_cap = int(pltpu.get_tpu_info().vmem_capacity_bytes)
    except Exception:
        vmem_cap = 64 * 1024 * 1024
    budget = int(0.55 * vmem_cap)

    lane_pref = 512 if budget <= 48 * 1024 * 1024 else 1024
    if tile_n is None:
        tn, N_pad = _lane_tile(out_features, pref=lane_pref)
    else:
        tn, N_pad = tile_n, _round_up(out_features, tile_n)
    if tile_k is None:
        tk, K_pad = _lane_tile(in_features, pref=lane_pref)
    else:
        tk, K_pad = tile_k, _round_up(in_features, tile_k)

    # Row tile: biggest sublane-aligned candidate that fits the VMEM budget.
    if tile_m is not None:
        tm = tile_m
    else:
        tm = sublane
        m_cap = _round_up(M, sublane)
        for cand in (1024, 768, 512, 384, 256, 128, 64, 32, 16, 8):
            t = min(_round_up(cand, sublane), m_cap)
            if _vmem_bytes(t, tn, tk, rank, itemsize) <= budget:
                tm = t
                break
    M_pad = _round_up(M, tm)

    # ---- zero-pad ragged extents (zeros contribute nothing; sliced off) ----
    x_p = x2d
    if M_pad != M or K_pad != in_features:
        x_p = jnp.pad(x2d, ((0, M_pad - M), (0, K_pad - in_features)))
    w_p = weight
    if N_pad != out_features or K_pad != in_features:
        w_p = jnp.pad(weight, ((0, N_pad - out_features), (0, K_pad - in_features)))
    a_t = lora_a.T                                   # (in_features, rank)
    if K_pad != in_features:
        a_t = jnp.pad(a_t, ((0, K_pad - in_features), (0, 0)))
    # Fold the LoRA scaling into B^T once on the host.
    b_t = (lora_b * scaling).astype(lora_b.dtype).T  # (rank, out_features)
    if N_pad != out_features:
        b_t = jnp.pad(b_t, ((0, 0), (0, N_pad - out_features)))
    if bias is None:
        bias2d = jnp.zeros((1, N_pad), dtype=dtype)
    else:
        bias2d = bias.reshape(1, out_features).astype(dtype)
        if N_pad != out_features:
            bias2d = jnp.pad(bias2d, ((0, 0), (0, N_pad - out_features)))

    grid = (M_pad // tm, N_pad // tn, K_pad // tk)

    flops = 2.0 * M_pad * K_pad * N_pad + 2.0 * M_pad * rank * (K_pad + N_pad)
    bytes_accessed = itemsize * (M_pad * K_pad + N_pad * K_pad + M_pad * N_pad
                                 + rank * (K_pad + N_pad) + N_pad)
    cost = pl.CostEstimate(flops=int(flops), transcendentals=0,
                           bytes_accessed=int(bytes_accessed))

    vmem_limit = int(min(vmem_cap - 4 * 1024 * 1024,
                         max(32 * 1024 * 1024,
                             _vmem_bytes(tm, tn, tk, rank, itemsize)
                             + 8 * 1024 * 1024)))

    out = pl.pallas_call(
        _adapter_linear_kernel,
        out_shape=jax.ShapeDtypeStruct((M_pad, N_pad), dtype),
        grid_spec=pltpu.PrefetchScalarGridSpec(
            num_scalar_prefetch=0,
            grid=grid,
            in_specs=[
                pl.BlockSpec((tm, tk), lambda i, j, k: (i, k)),    # x
                pl.BlockSpec((tn, tk), lambda i, j, k: (j, k)),    # W (out, in)
                pl.BlockSpec((tk, rank), lambda i, j, k: (k, 0)),  # A^T
                pl.BlockSpec((rank, tn), lambda i, j, k: (0, j)),  # scaled B^T
                pl.BlockSpec((1, tn), lambda i, j, k: (0, j)),     # bias
            ],
            out_specs=pl.BlockSpec((tm, tn), lambda i, j, k: (i, j)),
            scratch_shapes=[
                pltpu.VMEM((tm, tn), jnp.float32),    # base GEMM accumulator
                pltpu.VMEM((tm, rank), jnp.float32),  # h = x @ A^T (per row tile)
            ],
        ),
        compiler_params=pltpu.CompilerParams(
            # Shard only the row axis (keeps x residency and the j-carried h
            # scratch valid under v7x megacore); j and k carry state.
            dimension_semantics=("parallel", "arbitrary", "arbitrary"),
            vmem_limit_bytes=vmem_limit),
        cost_estimate=cost,
    )(x_p, w_p, a_t, b_t, bias2d)

    if M_pad != M or N_pad != out_features:
        out = out[:M, :out_features]
    return out.reshape(lead + (out_features,))


if __name__ == "__main__":
    # Small, deterministic config.
    batch, seq = 2, 8
    in_features = 256
    out_features = 384
    lora_r = 8
    lora_alpha = 16.0
    scaling = lora_alpha / math.sqrt(lora_r)          # HMoRA: alpha / sqrt(r)
    dtype = jnp.float32

    key = jax.random.PRNGKey(0)
    kx, kw, kb, ka = jax.random.split(key, 4)

    hidden_states = jax.random.normal(kx, (batch, seq, in_features), dtype=dtype)
    weight = jax.random.normal(kw, (out_features, in_features), dtype=dtype) * 0.05
    bias = jax.random.normal(kb, (out_features,), dtype=dtype) * 0.1

    # Parameter init matching reset_parameters():
    #   lora_a: kaiming_uniform_(a=sqrt(5)) -> U(-bound, bound), bound=1/sqrt(fan_in)
    #   lora_b: zeros (perturbed below so the adapter path is exercised).
    bound = 1.0 / math.sqrt(in_features)
    lora_a = jax.random.uniform(ka, (lora_r, in_features), dtype=dtype,
                                minval=-bound, maxval=bound)
    lora_b = 0.01 * jnp.arange(out_features * lora_r, dtype=dtype).reshape(
        out_features, lora_r)

    # Pure-JAX reference (same math as the PyTorch module in eval mode).
    hp = jax.lax.Precision.HIGHEST
    x2d = hidden_states.reshape(-1, in_features)
    base = jnp.dot(x2d, weight.T, precision=hp) + bias
    h = jnp.dot(x2d, lora_a.T, precision=hp)
    ref = jnp.dot(h, lora_b.T, precision=hp) * scaling + base
    ref = ref.reshape(batch, seq, out_features)

    # 1) Default auto-tiled path (single tile at these shapes).
    out = adapter_linear_forward(hidden_states, weight, bias, lora_a, lora_b,
                                 scaling=scaling)
    out = jax.block_until_ready(out)
    assert out.shape == ref.shape
    assert jnp.allclose(out, ref, atol=2e-2, rtol=2e-2), (
        "mismatch vs reference (auto tiles), max abs err "
        f"{float(jnp.max(jnp.abs(out - ref)))}")

    # 2) Forced small tiles to exercise the i/j/k grid, the k-accumulator and
    #    the j-carried h scratch: grid = (2, 3, 2).
    out2 = adapter_linear_forward(hidden_states, weight, bias, lora_a, lora_b,
                                  scaling=scaling,
                                  tile_m=8, tile_n=128, tile_k=128)
    out2 = jax.block_until_ready(out2)
    assert jnp.allclose(out2, ref, atol=2e-2, rtol=2e-2), (
        "mismatch vs reference (forced tiles), max abs err "
        f"{float(jnp.max(jnp.abs(out2 - ref)))}")

    print("KERNEL_OK")
</pallas_src>

<mosaic_0001>
module attributes {stable_mosaic.version = 11 : i64} {
  func.func @_adapter_linear_kernel(%arg0: i32, %arg1: i32, %arg2: i32, %arg3: memref<16x256xf32, #tpu.memory_space<vmem>>, %arg4: memref<384x256xf32, #tpu.memory_space<vmem>>, %arg5: memref<256x8xf32, #tpu.memory_space<vmem>>, %arg6: memref<8x384xf32, #tpu.memory_space<vmem>>, %arg7: memref<1x384xf32, #tpu.memory_space<vmem>>, %arg8: memref<16x384xf32, #tpu.memory_space<vmem>>, %arg9: memref<16x384xf32, #tpu.memory_space<vmem>>, %arg10: memref<16x8xf32, #tpu.memory_space<vmem>>) attributes {dimension_semantics = [#tpu.dimension_semantics<parallel>, #tpu.dimension_semantics<arbitrary>, #tpu.dimension_semantics<arbitrary>], iteration_bounds = array<i64: 1, 1, 1>, scalar_prefetch = 0 : i64, scratch_operands = 2 : i64, tpu.core_type = #tpu.core_type<tc>, window_params = [{transform_indices = @transform_0, window_bounds = array<i64: 16, 256>}, {transform_indices = @transform_1, window_bounds = array<i64: 384, 256>}, {transform_indices = @transform_2, window_bounds = array<i64: 256, 8>}, {transform_indices = @transform_3, window_bounds = array<i64: 8, 384>}, {transform_indices = @transform_4, window_bounds = array<i64: 1, 384>}, {transform_indices = @transform_5, window_bounds = array<i64: 16, 384>}]} {
    %c0_i32 = arith.constant 0 : i32
    %0 = arith.cmpi eq, %arg2, %c0_i32 : i32
    %1 = arith.extui %0 : i1 to i32
    %c0_i32_0 = arith.constant 0 : i32
    %2 = arith.cmpi ne, %1, %c0_i32_0 : i32
    scf.if %2 {
      %cst_15 = arith.constant 0.000000e+00 : f32
      %20 = vector.broadcast %cst_15 : f32 to vector<16x384xf32>
      %c0_16 = arith.constant 0 : index
      %c0_17 = arith.constant 0 : index
      %21 = vector.load %arg9[%c0_16, %c0_17] : memref<16x384xf32, #tpu.memory_space<vmem>>, vector<16x384xf32>
      tpu.vector_store %arg9[%c0_16, %c0_17], %20 {strides = array<i32>} : memref<16x384xf32, #tpu.memory_space<vmem>>, vector<16x384xf32>,
    } else {
    }
    %c0 = arith.constant 0 : index
    %c0_1 = arith.constant 0 : index
    %3 = vector.load %arg3[%c0, %c0_1] : memref<16x256xf32, #tpu.memory_space<vmem>>, vector<16x256xf32>
    %c0_2 = arith.constant 0 : index
    %c0_3 = arith.constant 0 : index
    %4 = vector.load %arg9[%c0_2, %c0_3] : memref<16x384xf32, #tpu.memory_space<vmem>>, vector<16x384xf32>
    %c0_4 = arith.constant 0 : index
    %c0_5 = arith.constant 0 : index
    %5 = vector.load %arg4[%c0_4, %c0_5] : memref<384x256xf32, #tpu.memory_space<vmem>>, vector<384x256xf32>
    %cst = arith.constant dense<0.000000e+00> : vector<16x384xf32>
    %6 = tpu.matmul %3, %5, %cst {dimension_numbers = #tpu.dot_dimension_numbers<[1], [1], [0], [0], [0, 0, 1, 0], [], []>} : vector<16x256xf32>, vector<384x256xf32>, vector<16x384xf32> -> vector<16x384xf32>
    %7 = arith.addf %4, %6 : vector<16x384xf32>
    %c0_6 = arith.constant 0 : index
    %c0_7 = arith.constant 0 : index
    %8 = vector.load %arg9[%c0_6, %c0_7] : memref<16x384xf32, #tpu.memory_space<vmem>>, vector<16x384xf32>
    tpu.vector_store %arg9[%c0_6, %c0_7], %7 {strides = array<i32>} : memref<16x384xf32, #tpu.memory_space<vmem>>, vector<16x384xf32>,
    %c0_i32_8 = arith.constant 0 : i32
    %9 = arith.cmpi eq, %arg1, %c0_i32_8 : i32
    %c0_i32_9 = arith.constant 0 : i32
    %10 = arith.cmpi eq, %arg2, %c0_i32_9 : i32
    %11 = arith.andi %9, %10 : i1
    %12 = arith.extui %11 : i1 to i32
    %c0_i32_10 = arith.constant 0 : i32
    %13 = arith.cmpi ne, %12, %c0_i32_10 : i32
    scf.if %13 {
      %cst_15 = arith.constant 0.000000e+00 : f32
      %20 = vector.broadcast %cst_15 : f32 to vector<16x8xf32>
      %c0_16 = arith.constant 0 : index
      %c0_17 = arith.constant 0 : index
      %21 = vector.load %arg10[%c0_16, %c0_17] : memref<16x8xf32, #tpu.memory_space<vmem>>, vector<16x8xf32>
      tpu.vector_store %arg10[%c0_16, %c0_17], %20 {strides = array<i32>} : memref<16x8xf32, #tpu.memory_space<vmem>>, vector<16x8xf32>,
    } else {
    }
    %c0_i32_11 = arith.constant 0 : i32
    %14 = arith.cmpi eq, %arg1, %c0_i32_11 : i32
    %15 = arith.extui %14 : i1 to i32
    %c0_i32_12 = arith.constant 0 : i32
    %16 = arith.cmpi ne, %15, %c0_i32_12 : i32
    scf.if %16 {
      %c0_15 = arith.constant 0 : index
      %c0_16 = arith.constant 0 : index
      %20 = vector.load %arg10[%c0_15, %c0_16] : memref<16x8xf32, #tpu.memory_space<vmem>>, vector<16x8xf32>
      %c0_17 = arith.constant 0 : index
      %c0_18 = arith.constant 0 : index
      %21 = vector.load %arg5[%c0_17, %c0_18] : memref<256x8xf32, #tpu.memory_space<vmem>>, vector<256x8xf32>
      %cst_19 = arith.constant dense<0.000000e+00> : vector<16x8xf32>
      %22 = tpu.matmul %3, %21, %cst_19 {dimension_numbers = #tpu.dot_dimension_numbers<[1], [0], [0], [1], [0, 0, 1, 1], [], []>} : vector<16x256xf32>, vector<256x8xf32>, vector<16x8xf32> -> vector<16x8xf32>
      %23 = arith.addf %20, %22 : vector<16x8xf32>
      %c0_20 = arith.constant 0 : index
      %c0_21 = arith.constant 0 : index
      %24 = vector.load %arg10[%c0_20, %c0_21] : memref<16x8xf32, #tpu.memory_space<vmem>>, vector<16x8xf32>
      tpu.vector_store %arg10[%c0_20, %c0_21], %23 {strides = array<i32>} : memref<16x8xf32, #tpu.memory_space<vmem>>, vector<16x8xf32>,
    } else {
    }
    %c0_i32_13 = arith.constant 0 : i32
    %17 = arith.cmpi eq, %arg2, %c0_i32_13 : i32
    %18 = arith.extui %17 : i1 to i32
    %c0_i32_14 = arith.constant 0 : i32
    %19 = arith.cmpi ne, %18, %c0_i32_14 : i32
    scf.if %19 {
      %c0_15 = arith.constant 0 : index
      %c0_16 = arith.constant 0 : index
      %20 = vector.load %arg10[%c0_15, %c0_16] : memref<16x8xf32, #tpu.memory_space<vmem>>, vector<16x8xf32>
      %c0_17 = arith.constant 0 : index
      %c0_18 = arith.constant 0 : index
      %21 = vector.load %arg6[%c0_17, %c0_18] : memref<8x384xf32, #tpu.memory_space<vmem>>, vector<8x384xf32>
      %cst_19 = arith.constant dense<0.000000e+00> : vector<16x384xf32>
      %22 = tpu.matmul %20, %21, %cst_19 {dimension_numbers = #tpu.dot_dimension_numbers<[1], [0], [0], [1], [0, 0, 1, 1], [], []>} : vector<16x8xf32>, vector<8x384xf32>, vector<16x384xf32> -> vector<16x384xf32>
      %c0_20 = arith.constant 0 : index
      %c0_21 = arith.constant 0 : index
      %23 = vector.load %arg9[%c0_20, %c0_21] : memref<16x384xf32, #tpu.memory_space<vmem>>, vector<16x384xf32>
      %24 = arith.addf %23, %22 : vector<16x384xf32>
      %c0_22 = arith.constant 0 : index
      %c0_23 = arith.constant 0 : index
      %25 = vector.load %arg7[%c0_22, %c0_23] : memref<1x384xf32, #tpu.memory_space<vmem>>, vector<1x384xf32>
      %26 = vector.broadcast %25 : vector<1x384xf32> to vector<16x384xf32>
      %27 = arith.addf %24, %26 : vector<16x384xf32>
      %c0_24 = arith.constant 0 : index
      %c0_25 = arith.constant 0 : index
      %28 = vector.load %arg8[%c0_24, %c0_25] : memref<16x384xf32, #tpu.memory_space<vmem>>, vector<16x384xf32>
      tpu.vector_store %arg8[%c0_24, %c0_25], %27 {strides = array<i32>} : memref<16x384xf32, #tpu.memory_space<vmem>>, vector<16x384xf32>,
    } else {
    }
    return
  }
  func.func @transform_0(%arg0: i32, %arg1: i32, %arg2: i32) -> (i32, i32) {
    %c0_i32 = arith.constant 0 : i32
    return %arg0, %arg2 : i32, i32
  }
  func.func @transform_1(%arg0: i32, %arg1: i32, %arg2: i32) -> (i32, i32) {
    %c0_i32 = arith.constant 0 : i32
    return %arg1, %arg2 : i32, i32
  }
  func.func @transform_2(%arg0: i32, %arg1: i32, %arg2: i32) -> (i32, i32) {
    %c0_i32 = arith.constant 0 : i32
    %c0_i32_0 = arith.constant 0 : i32
    return %arg2, %c0_i32 : i32, i32
  }
  func.func @transform_3(%arg0: i32, %arg1: i32, %arg2: i32) -> (i32, i32) {
    %c0_i32 = arith.constant 0 : i32
    %c0_i32_0 = arith.constant 0 : i32
    return %c0_i32, %arg1 : i32, i32
  }
  func.func @transform_4(%arg0: i32, %arg1: i32, %arg2: i32) -> (i32, i32) {
    %c0_i32 = arith.constant 0 : i32
    %c0_i32_0 = arith.constant 0 : i32
    return %c0_i32, %arg1 : i32, i32
  }
  func.func @transform_5(%arg0: i32, %arg1: i32, %arg2: i32) -> (i32, i32) {
    %c0_i32 = arith.constant 0 : i32
    return %arg0, %arg1 : i32, i32
  }
}

</mosaic_0001>

<llo_original>
// kernel: tpu_custom_call.1
$region0: #{tpu_custom_call.1}
  #allocation0 [shape = 'u32[]', space=smem, size = 0x4, offset = 0x4, fixed_abs, tag = 'smem constant byte address 0x4 - core index']
  #allocation1 [shape = 'u32[144,128]{1,0:T(1,128)}', space=vmem, size = 0x12000, scoped, tag = 'internal scratch']
  #allocation2 [shape = 'f32[16,384]{1,0:T(8,128)}', space=vmem, size = 0x6000, scoped, tag = 'scratch operand']
  #allocation3 [shape = 'f32[16,8]{1,0:T(8,128)}', space=vmem, size = 0x2000, scoped, tag = 'scratch operand']
  %s0 = inlined_call_operand.vmem [shape: f32[16,256], index: 0, kind: input, shape index: {}]
  %s1 = inlined_call_operand.hbm [shape: f32[384,256], index: 1, kind: input, shape index: {}]
  %s2 = inlined_call_operand.vmem [shape: f32[256,8], index: 2, kind: input, shape index: {}]
  %s3 = inlined_call_operand.vmem [shape: f32[8,384], index: 3, kind: input, shape index: {}]
  %s4 = inlined_call_operand.vmem [shape: f32[1,384], index: 4, kind: input, shape index: {}]
  %s5 = inlined_call_operand.hbm [shape: f32[16,384], index: 5, kind: output, shape index: {}]
  %s6 = sld [smem:[#allocation0]]
  $region50: #{tpu_custom_call.1} parent=0
    _
  %s8 = ssub.s32 1, %s6
  %s9 = scalar_select 0, %s8, %s6
  $region1: #{tpu_custom_call.1} parent=0
    #allocation4 [shape = 'u8[393216]{0}', space=vmem, size = 0x60000, scoped, tag = 'input window, operand 1, single buffered']
    #allocation5 [shape = 's32[1]{0}', space=sflag, size = 0x4, scoped, tag = 'scoped memory for tpu_custom_call.1']
    #allocation6 [shape = 's32[1]{0}', space=sflag, size = 0x4, scoped, tag = 'scoped memory for tpu_custom_call.1']
    #allocation7 [shape = 'u8[24576]{0}', space=vmem, size = 0x6000, scoped, tag = 'output window, operand 0, single buffered']
    %10 = vsyncpa [#allocation5], 0
    %11 = vsyncpa [#allocation6], 0
    // Predicated region
    $region2: #{tpu_custom_call.1} parent=1 // pred_check
      _
    $region3: #{tpu_custom_call.1} parent=1 // pred_check_branch
      %13 = sbr.rel (0) target = $region5
    $region4: #{tpu_custom_call.1} parent=1 // pred_region
      _
    $region5: #{tpu_custom_call.1} parent=1 // pred_fallthru
      _
    // Predicated region
    $region6: #{tpu_custom_call.1} parent=1 // pred_check
      _
    $region7: #{tpu_custom_call.1} parent=1 // pred_check_branch
      %15 = sbr.rel (0) target = $region9
    $region8: #{tpu_custom_call.1} parent=1 // pred_region
      %s17 = ssub.s32 12288, 12288
      %18 = vsyncadd [#allocation5], %s17
      %s19 = sshll.u32 [#allocation4], 4
      %s20 = int_to_ptr.vmem [resolvable:$true] %s19
      %25 = dma.hbm_to_vmem [thread:$0]  %s1, 12288, %s20, [#allocation5], 256, 256, 16
    $region9: #{tpu_custom_call.1} parent=1 // pred_fallthru
      _
    // Predicated region
    $region10: #{tpu_custom_call.1} parent=1 // pred_check
      _
    $region11: #{tpu_custom_call.1} parent=1 // pred_check_branch
      %27 = sbr.rel (0) target = $region13
    $region12: #{tpu_custom_call.1} parent=1 // pred_region
      _
    $region13: #{tpu_custom_call.1} parent=1 // pred_fallthru
      _
    // Predicated region
    $region14: #{tpu_custom_call.1} parent=1 // pred_check
      _
    $region15: #{tpu_custom_call.1} parent=1 // pred_check_branch
      %29 = sbr.rel (0) target = $region17
    $region16: #{tpu_custom_call.1} parent=1 // pred_region
      _
    $region17: #{tpu_custom_call.1} parent=1 // pred_fallthru
      _
    // Predicated region
    $region18: #{tpu_custom_call.1} parent=1 // pred_check
      _
    $region19: #{tpu_custom_call.1} parent=1 // pred_check_branch
      %31 = sbr.rel (0) target = $region21
    $region20: #{tpu_custom_call.1} parent=1 // pred_region
      _
    $region21: #{tpu_custom_call.1} parent=1 // pred_fallthru
      _
    // Predicated region
    $region22: #{tpu_custom_call.1} parent=1 // pred_check
      _
    $region23: #{tpu_custom_call.1} parent=1 // pred_check_branch
      %33 = sbr.rel (0) target = $region25
    $region24: #{tpu_custom_call.1} parent=1 // pred_region
      %34 = dma.done [#allocation5], 12288
    $region25: #{tpu_custom_call.1} parent=1 // pred_fallthru
      _
    %p35 = scmp.eq.s32.totalorder 0, 0
    // Predicated region
    $region26: #{tpu_custom_call.1} parent=1 // pred_check
      %p36 = pneg %p35
    $region27: #{tpu_custom_call.1} parent=1 // pred_check_branch
      %38 = sbr.rel (%p36) target = $region29
    $region28: #{tpu_custom_call.1} parent=1 // pred_region
      %39 = vst [vmem:[#allocation2] sm:$0xff] 0.0
      %40 = vst [vmem:[#allocation2 + $0x8] sm:$0xff] 0.0
      %41 = vst [vmem:[#allocation2 + $0x10] sm:$0xff] 0.0
      %42 = vst [vmem:[#allocation2 + $0x18] sm:$0xff] 0.0
      %43 = vst [vmem:[#allocation2 + $0x20] sm:$0xff] 0.0
      %44 = vst [vmem:[#allocation2 + $0x28] sm:$0xff] 0.0
    $region29: #{tpu_custom_call.1} parent=1 // pred_fallthru
      _
    %v45 = vld [vmem:[%s0] sm:$0xff]
    %v46 = vld [vmem:[%s0 + $0x8] sm:$0xff]
    %v47 = vld [vmem:[%s0 + $0x10] sm:$0xff]
    %v48 = vld [vmem:[%s0 + $0x18] sm:$0xff]
    %v49 = vld [vmem:[#allocation2] sm:$0xff]
    %v50 = vld [vmem:[#allocation2 + $0x8] sm:$0xff]
    %v51 = vld [vmem:[#allocation2 + $0x10] sm:$0xff]
    %v52 = vld [vmem:[#allocation2 + $0x18] sm:$0xff]
    %v53 = vld [vmem:[#allocation2 + $0x20] sm:$0xff]
    %v54 = vld [vmem:[#allocation2 + $0x28] sm:$0xff]
    %v55 = vld [vmem:[#allocation4] sm:$0xff]
    %v56 = vld [vmem:[#allocation4 + $0x8] sm:$0xff]
    %v57 = vld [vmem:[#allocation4 + $0x10] sm:$0xff]
    %v58 = vld [vmem:[#allocation4 + $0x18] sm:$0xff]
    %v59 = vld [vmem:[#allocation4 + $0x20] sm:$0xff]
    %v60 = vld [vmem:[#allocation4 + $0x28] sm:$0xff]
    %v61 = vld [vmem:[#allocation4 + $0x30] sm:$0xff]
    %v62 = vld [vmem:[#allocation4 + $0x38] sm:$0xff]
    %v63 = vld [vmem:[#allocation4 + $0x40] sm:$0xff]
    %v64 = vld [vmem:[#allocation4 + $0x48] sm:$0xff]
    %v65 = vld [vmem:[#allocation4 + $0x50] sm:$0xff]
    %v66 = vld [vmem:[#allocation4 + $0x58] sm:$0xff]
    %v67 = vld [vmem:[#allocation4 + $0x60] sm:$0xff]
    %v68 = vld [vmem:[#allocation4 + $0x68] sm:$0xff]
    %v69 = vld [vmem:[#allocation4 + $0x70] sm:$0xff]
    %v70 = vld [vmem:[#allocation4 + $0x78] sm:$0xff]
    %v71 = vld [vmem:[#allocation4 + $0x80] sm:$0xff]
    %v72 = vld [vmem:[#allocation4 + $0x88] sm:$0xff]
    %v73 = vld [vmem:[#allocation4 + $0x90] sm:$0xff]
    %v74 = vld [vmem:[#allocation4 + $0x98] sm:$0xff]
    %v75 = vld [vmem:[#allocation4 + $0xa0] sm:$0xff]
    %v76 = vld [vmem:[#allocation4 + $0xa8] sm:$0xff]
    %v77 = vld [vmem:[#allocation4 + $0xb0] sm:$0xff]
    %v78 = vld [vmem:[#allocation4 + $0xb8] sm:$0xff]
    %v79 = vld [vmem:[#allocation4 + $0xc0] sm:$0xff]
    %v80 = vld [vmem:[#allocation4 + $0xc8] sm:$0xff]
    %v81 = vld [vmem:[#allocation4 + $0xd0] sm:$0xff]
    %v82 = vld [vmem:[#allocation4 + $0xd8] sm:$0xff]
    %v83 = vld [vmem:[#allocation4 + $0xe0] sm:$0xff]
    %v84 = vld [vmem:[#allocation4 + $0xe8] sm:$0xff]
    %v85 = vld [vmem:[#allocation4 + $0xf0] sm:$0xff]
    %v86 = vld [vmem:[#allocation4 + $0xf8] sm:$0xff]
    %v87 = vld [vmem:[#allocation4 + $0x100] sm:$0xff]
    %v88 = vld [vmem:[#allocation4 + $0x108] sm:$0xff]
    %v89 = vld [vmem:[#allocation4 + $0x110] sm:$0xff]
    %v90 = vld [vmem:[#allocation4 + $0x118] sm:$0xff]
    %v91 = vld [vmem:[#allocation4 + $0x120] sm:$0xff]
    %v92 = vld [vmem:[#allocation4 + $0x128] sm:$0xff]
    %v93 = vld [vmem:[#allocation4 + $0x130] sm:$0xff]
    %v94 = vld [vmem:[#allocation4 + $0x138] sm:$0xff]
    %v95 = vld [vmem:[#allocation4 + $0x140] sm:$0xff]
    %v96 = vld [vmem:[#allocation4 + $0x148] sm:$0xff]
    %v97 = vld [vmem:[#allocation4 + $0x150] sm:$0xff]
    %v98 = vld [vmem:[#allocation4 + $0x158] sm:$0xff]
    %v99 = vld [vmem:[#allocation4 + $0x160] sm:$0xff]
    %v100 = vld [vmem:[#allocation4 + $0x168] sm:$0xff]
    %v101 = vld [vmem:[#allocation4 + $0x170] sm:$0xff]
    %v102 = vld [vmem:[#allocation4 + $0x178] sm:$0xff]
    %v103 = vld [vmem:[#allocation4 + $0x180] sm:$0xff]
    %v104 = vld [vmem:[#allocation4 + $0x188] sm:$0xff]
    %v105 = vld [vmem:[#allocation4 + $0x190] sm:$0xff]
    %v106 = vld [vmem:[#allocation4 + $0x198] sm:$0xff]
    %v107 = vld [vmem:[#allocation4 + $0x1a0] sm:$0xff]
    %v108 = vld [vmem:[#allocation4 + $0x1a8] sm:$0xff]
    %v109 = vld [vmem:[#allocation4 + $0x1b0] sm:$0xff]
    %v110 = vld [vmem:[#allocation4 + $0x1b8] sm:$0xff]
    %v111 = vld [vmem:[#allocation4 + $0x1c0] sm:$0xff]
    %v112 = vld [vmem:[#allocation4 + $0x1c8] sm:$0xff]
    %v113 = vld [vmem:[#allocation4 + $0x1d0] sm:$0xff]
    %v114 = vld [vmem:[#allocation4 + $0x1d8] sm:$0xff]
    %v115 = vld [vmem:[#allocation4 + $0x1e0] sm:$0xff]
    %v116 = vld [vmem:[#allocation4 + $0x1e8] sm:$0xff]
    %v117 = vld [vmem:[#allocation4 + $0x1f0] sm:$0xff]
    %v118 = vld [vmem:[#allocation4 + $0x1f8] sm:$0xff]
    %v119 = vld [vmem:[#allocation4 + $0x200] sm:$0xff]
    %v120 = vld [vmem:[#allocation4 + $0x208] sm:$0xff]
    %v121 = vld [vmem:[#allocation4 + $0x210] sm:$0xff]
    %v122 = vld [vmem:[#allocation4 + $0x218] sm:$0xff]
    %v123 = vld [vmem:[#allocation4 + $0x220] sm:$0xff]
    %v124 = vld [vmem:[#allocation4 + $0x228] sm:$0xff]
    %v125 = vld [vmem:[#allocation4 + $0x230] sm:$0xff]
    %v126 = vld [vmem:[#allocation4 + $0x238] sm:$0xff]
    %v127 = vld [vmem:[#allocation4 + $0x240] sm:$0xff]
    %v128 = vld [vmem:[#allocation4 + $0x248] sm:$0xff]
    %v129 = vld [vmem:[#allocation4 + $0x250] sm:$0xff]
    %v130 = vld [vmem:[#allocation4 + $0x258] sm:$0xff]
    %v131 = vld [vmem:[#allocation4 + $0x260] sm:$0xff]
    %v132 = vld [vmem:[#allocation4 + $0x268] sm:$0xff]
    %v133 = vld [vmem:[#allocation4 + $0x270] sm:$0xff]
    %v134 = vld [vmem:[#allocation4 + $0x278] sm:$0xff]
    %v135 = vld [vmem:[#allocation4 + $0x280] sm:$0xff]
    %v136 = vld [vmem:[#allocation4 + $0x288] sm:$0xff]
    %v137 = vld [vmem:[#allocation4 + $0x290] sm:$0xff]
    %v138 = vld [vmem:[#allocation4 + $0x298] sm:$0xff]
    %v139 = vld [vmem:[#allocation4 + $0x2a0] sm:$0xff]
    %v140 = vld [vmem:[#allocation4 + $0x2a8] sm:$0xff]
    %v141 = vld [vmem:[#allocation4 + $0x2b0] sm:$0xff]
    %v142 = vld [vmem:[#allocation4 + $0x2b8] sm:$0xff]
    %v143 = vld [vmem:[#allocation4 + $0x2c0] sm:$0xff]
    %v144 = vld [vmem:[#allocation4 + $0x2c8] sm:$0xff]
    %v145 = vld [vmem:[#allocation4 + $0x2d0] sm:$0xff]
    %v146 = vld [vmem:[#allocation4 + $0x2d8] sm:$0xff]
    %v147 = vld [vmem:[#allocation4 + $0x2e0] sm:$0xff]
    %v148 = vld [vmem:[#allocation4 + $0x2e8] sm:$0xff]
    %v149 = vld [vmem:[#allocation4 + $0x2f0] sm:$0xff]
    %v150 = vld [vmem:[#allocation4 + $0x2f8] sm:$0xff]
    %151 = vmatprep.subr.mxu0 %v56
    %152 = vmatpush1.xpose.msra.mxu0 %v55
    %153 = vmatprep.subr.mxu0 %v58
    %154 = vmatpush1.xpose.msra.mxu0 %v57
    %155 = vmatprep.subr.mxu0 %v60
    %156 = vmatpush1.xpose.msra.mxu0 %v59
    %157 = vmatprep.subr.mxu0 %v62
    %158 = vmatpush1.xpose.msra.mxu0 %v61
    %159 = vmatprep.subr.mxu0 %v64
    %160 = vmatpush1.xpose.msra.mxu0 %v63
    %161 = vmatprep.subr.mxu0 %v66
    %162 = vmatpush1.xpose.msra.mxu0 %v65
    %163 = vmatprep.subr.mxu0 %v68
    %164 = vmatpush1.xpose.msra.mxu0 %v67
    %165 = vmatprep.subr.mxu0 %v70
    %166 = vmatpush1.xpose.msra.mxu0 %v69
    %167 = vmatprep.subr.mxu0 %v72
    %168 = vmatpush1.xpose.msra.mxu0 %v71
    %169 = vmatprep.subr.mxu0 %v74
    %170 = vmatpush1.xpose.msra.mxu0 %v73
    %171 = vmatprep.subr.mxu0 %v76
    %172 = vmatpush1.xpose.msra.mxu0 %v75
    %173 = vmatprep.subr.mxu0 %v78
    %174 = vmatpush1.xpose.msra.mxu0 %v77
    %175 = vmatprep.subr.mxu0 %v80
    %176 = vmatpush1.xpose.msra.mxu0 %v79
    %177 = vmatprep.subr.mxu0 %v82
    %178 = vmatpush1.xpose.msra.mxu0 %v81
    %179 = vmatprep.subr.mxu0 %v84
    %180 = vmatpush1.xpose.msra.mxu0 %v83
    %181 = vmatprep.subr.mxu0 %v86
    %182 = vmatpush1.xpose.msra.mxu0 %v85
    %183 = vmatprep.subr.mxu0 %v88
    %184 = vmatpush1.xpose.msra.mxu0 %v87
    %185 = vmatprep.subr.mxu0 %v90
    %186 = vmatpush1.xpose.msra.mxu0 %v89
    %187 = vmatprep.subr.mxu0 %v92
    %188 = vmatpush1.xpose.msra.mxu0 %v91
    %189 = vmatprep.subr.mxu0 %v94
    %190 = vmatpush1.xpose.msra.mxu0 %v93
    %191 = vmatprep.subr.mxu0 %v96
    %192 = vmatpush1.xpose.msra.mxu0 %v95
    %193 = vmatprep.subr.mxu0 %v98
    %194 = vmatpush1.xpose.msra.mxu0 %v97
    %195 = vmatprep.subr.mxu0 %v100
    %196 = vmatpush1.xpose.msra.mxu0 %v99
    %197 = vmatprep.subr.mxu0 %v102
    %198 = vmatpush1.xpose.msra.mxu0 %v101
    %199 = vmatprep.subr.mxu0 %v104
    %200 = vmatpush1.xpose.msra.mxu0 %v103
    %201 = vmatprep.subr.mxu0 %v106
    %202 = vmatpush1.xpose.msra.mxu0 %v105
    %203 = vmatprep.subr.mxu0 %v108
    %204 = vmatpush1.xpose.msra.mxu0 %v107
    %205 = vmatprep.subr.mxu0 %v110
    %206 = vmatpush1.xpose.msra.mxu0 %v109
    %207 = vmatprep.subr.mxu0 %v112
    %208 = vmatpush1.xpose.msra.mxu0 %v111
    %209 = vmatprep.subr.mxu0 %v114
    %210 = vmatpush1.xpose.msra.mxu0 %v113
    %211 = vmatprep.subr.mxu0 %v116
    %212 = vmatpush1.xpose.msra.mxu0 %v115
    %213 = vmatprep.subr.mxu0 %v118
    %214 = vmatpush1.xpose.msra.mxu0 %v117
    %215 = vmatprep.mubr.f32.mxu0 %v46
    %216 = vmatmul.mubr.f32.gmra.mrb[0].mxu0 %v45
    %v217 = vpop.f32.mrb[0].mxu0
    %v218 = vadd.f32 0.0, %v217
    %v219 = vpop.f32.mrb[0].mxu0
    %v220 = vadd.f32 0.0, %v219
    %221 = vmatprep.mubr.f32.mxu0 %v48
    %222 = vmatmul.mubr.f32.gmra.mrb[0].mxu0 %v47
    %v223 = vpop.f32.mrb[0].mxu0
    %v224 = vadd.f32 0.0, %v223
    %v225 = vpop.f32.mrb[0].mxu0
    %v226 = vadd.f32 0.0, %v225
    %227 = vdwg.mxu0
    %228 = vmatprep.subr.mxu0 %v120
    %229 = vmatpush1.xpose.msra.mxu0 %v119
    %230 = vmatprep.subr.mxu0 %v122
    %231 = vmatpush1.xpose.msra.mxu0 %v121
    %232 = vmatprep.subr.mxu0 %v124
    %233 = vmatpush1.xpose.msra.mxu0 %v123
    %234 = vmatprep.subr.mxu0 %v126
    %235 = vmatpush1.xpose.msra.mxu0 %v125
    %236 = vmatprep.subr.mxu0 %v128
    %237 = vmatpush1.xpose.msra.mxu0 %v127
    %238 = vmatprep.subr.mxu0 %v130
    %239 = vmatpush1.xpose.msra.mxu0 %v129
    %240 = vmatprep.subr.mxu0 %v132
    %241 = vmatpush1.xpose.msra.mxu0 %v131
    %242 = vmatprep.subr.mxu0 %v134
    %243 = vmatpush1.xpose.msra.mxu0 %v133
    %244 = vmatprep.subr.mxu0 %v136
    %245 = vmatpush1.xpose.msra.mxu0 %v135
    %246 = vmatprep.subr.mxu0 %v138
    %247 = vmatpush1.xpose.msra.mxu0 %v137
    %248 = vmatprep.subr.mxu0 %v140
    %249 = vmatpush1.xpose.msra.mxu0 %v139
    %250 = vmatprep.subr.mxu0 %v142
    %251 = vmatpush1.xpose.msra.mxu0 %v141
    %252 = vmatprep.subr.mxu0 %v144
    %253 = vmatpush1.xpose.msra.mxu0 %v143
    %254 = vmatprep.subr.mxu0 %v146
    %255 = vmatpush1.xpose.msra.mxu0 %v145
    %256 = vmatprep.subr.mxu0 %v148
    %257 = vmatpush1.xpose.msra.mxu0 %v147
    %258 = vmatprep.subr.mxu0 %v150
    %259 = vmatpush1.xpose.msra.mxu0 %v149
    %260 = vmatprep.subr.mxu0 0.0
    %261 = vmatpush1.xpose.msra.mxu0 0.0
    %262 = vmatprep.subr.mxu0 0.0
    %263 = vmatpush1.xpose.msra.mxu0 0.0
    %264 = vmatprep.subr.mxu0 0.0
    %265 = vmatpush1.xpose.msra.mxu0 0.0
    %266 = vmatprep.subr.mxu0 0.0
    %267 = vmatpush1.xpose.msra.mxu0 0.0
    %268 = vmatprep.subr.mxu0 0.0
    %269 = vmatpush1.xpose.msra.mxu0 0.0
    %270 = vmatprep.subr.mxu0 0.0
    %271 = vmatpush1.xpose.msra.mxu0 0.0
    %272 = vmatprep.subr.mxu0 0.0
    %273 = vmatpush1.xpose.msra.mxu0 0.0
    %274 = vmatprep.subr.mxu0 0.0
    %275 = vmatpush1.xpose.msra.mxu0 0.0
    %276 = vmatprep.subr.mxu0 0.0
    %277 = vmatpush1.xpose.msra.mxu0 0.0
    %278 = vmatprep.subr.mxu0 0.0
    %279 = vmatpush1.xpose.msra.mxu0 0.0
    %280 = vmatprep.subr.mxu0 0.0
    %281 = vmatpush1.xpose.msra.mxu0 0.0
    %282 = vmatprep.subr.mxu0 0.0
    %283 = vmatpush1.xpose.msra.mxu0 0.0
    %284 = vmatprep.subr.mxu0 0.0
    %285 = vmatpush1.xpose.msra.mxu0 0.0
    %286 = vmatprep.subr.mxu0 0.0
    %287 = vmatpush1.xpose.msra.mxu0 0.0
    %288 = vmatprep.subr.mxu0 0.0
    %289 = vmatpush1.xpose.msra.mxu0 0.0
    %290 = vmatprep.subr.mxu0 0.0
    %291 = vmatpush1.xpose.msra.mxu0 0.0
    %292 = vmatprep.mubr.f32.mxu0 %v46
    %293 = vmatmul.mubr.f32.gmra.mrb[0].mxu0 %v45
    %v294 = vpop.f32.mrb[0].mxu0
    %v295 = vadd.f32 0.0, %v294
    %v296 = vpop.f32.mrb[0].mxu0
    %297 = vmatprep.mubr.f32.mxu0 %v48
    %298 = vmatmul.mubr.f32.gmra.mrb[0].mxu0 %v47
    %v299 = vpop.f32.mrb[0].mxu0
    %v300 = vadd.f32 0.0, %v299
    %v301 = vpop.f32.mrb[0].mxu0
    %302 = vdwg.mxu0
    %v303 = vadd.f32 %v49, %v218
    %v304 = vadd.f32 %v50, %v220
    %v305 = vadd.f32 %v51, %v295
    %v306 = vadd.f32 %v52, %v224
    %v307 = vadd.f32 %v53, %v226
    %v308 = vadd.f32 %v54, %v300
    %309 = vst [vmem:[#allocation2] sm:$0xff] %v303
    %310 = vst [vmem:[#allocation2 + $0x8] sm:$0xff] %v304
    %311 = vst [vmem:[#allocation2 + $0x10] sm:$0xff] %v305
    %312 = vst [vmem:[#allocation2 + $0x18] sm:$0xff] %v306
    %313 = vst [vmem:[#allocation2 + $0x20] sm:$0xff] %v307
    %314 = vst [vmem:[#allocation2 + $0x28] sm:$0xff] %v308
    %p315 = scmp.eq.s32.totalorder 0, 0
    %p316 = pnand %p315, %p35
    %p317 = pneg %p316
    // Predicated region
    $region30: #{tpu_custom_call.1} parent=1 // pred_check
      _
    $region31: #{tpu_custom_call.1} parent=1 // pred_check_branch
      %319 = sbr.rel (%p316) target = $region33
    $region32: #{tpu_custom_call.1} parent=1 // pred_region
      %vm320 = vcmask 64512
      %321 = vst.msk [vmem:[#allocation3] sm:$0xff] %vm320, 0.0
      %322 = vst.msk [vmem:[#allocation3 + $0x8] sm:$0xff] %vm320, 0.0
    $region33: #{tpu_custom_call.1} parent=1 // pred_fallthru
      _
    // Predicated region
    $region34: #{tpu_custom_call.1} parent=1 // pred_check
      %p323 = pneg %p315
    $region35: #{tpu_custom_call.1} parent=1 // pred_check_branch
      %325 = sbr.rel (%p323) target = $region37
    $region36: #{tpu_custom_call.1} parent=1 // pred_region
      %v326 = vld [vmem:[#allocation3] sm:$0xff]
      %v327 = vld [vmem:[#allocation3 + $0x8] sm:$0xff]
      %v328 = vld [vmem:[%s2] sm:$0xff]
      %v329 = vld [vmem:[%s2 + $0x8] sm:$0xff]
      %v330 = vld [vmem:[%s2 + $0x10] sm:$0xff]
      %v331 = vld [vmem:[%s2 + $0x18] sm:$0xff]
      %v332 = vld [vmem:[%s2 + $0x20] sm:$0xff]
      %v333 = vld [vmem:[%s2 + $0x28] sm:$0xff]
      %v334 = vld [vmem:[%s2 + $0x30] sm:$0xff]
      %v335 = vld [vmem:[%s2 + $0x38] sm:$0xff]
      %v336 = vld [vmem:[%s2 + $0x40] sm:$0xff]
      %v337 = vld [vmem:[%s2 + $0x48] sm:$0xff]
      %v338 = vld [vmem:[%s2 + $0x50] sm:$0xff]
      %v339 = vld [vmem:[%s2 + $0x58] sm:$0xff]
      %v340 = vld [vmem:[%s2 + $0x60] sm:$0xff]
      %v341 = vld [vmem:[%s2 + $0x68] sm:$0xff]
      %v342 = vld [vmem:[%s2 + $0x70] sm:$0xff]
      %v343 = vld [vmem:[%s2 + $0x78] sm:$0xff]
      %v344 = vld [vmem:[%s2 + $0x80] sm:$0xff]
      %v345 = vld [vmem:[%s2 + $0x88] sm:$0xff]
      %v346 = vld [vmem:[%s2 + $0x90] sm:$0xff]
      %v347 = vld [vmem:[%s2 + $0x98] sm:$0xff]
      %v348 = vld [vmem:[%s2 + $0xa0] sm:$0xff]
      %v349 = vld [vmem:[%s2 + $0xa8] sm:$0xff]
      %v350 = vld [vmem:[%s2 + $0xb0] sm:$0xff]
      %v351 = vld [vmem:[%s2 + $0xb8] sm:$0xff]
      %v352 = vld [vmem:[%s2 + $0xc0] sm:$0xff]
      %v353 = vld [vmem:[%s2 + $0xc8] sm:$0xff]
      %v354 = vld [vmem:[%s2 + $0xd0] sm:$0xff]
      %v355 = vld [vmem:[%s2 + $0xd8] sm:$0xff]
      %v356 = vld [vmem:[%s2 + $0xe0] sm:$0xff]
      %v357 = vld [vmem:[%s2 + $0xe8] sm:$0xff]
      %v358 = vld [vmem:[%s2 + $0xf0] sm:$0xff]
      %v359 = vld [vmem:[%s2 + $0xf8] sm:$0xff]
      %360 = vmatprep.subr.mxu0 0.0
      %361 = vmatpush1.msra.mxu0 %v328
      %362 = vmatprep.subr.mxu0 0.0
      %363 = vmatpush1.msra.mxu0 %v329
      %364 = vmatprep.subr.mxu0 0.0
      %365 = vmatpush1.msra.mxu0 %v330
      %366 = vmatprep.subr.mxu0 0.0
      %367 = vmatpush1.msra.mxu0 %v331
      %368 = vmatprep.subr.mxu0 0.0
      %369 = vmatpush1.msra.mxu0 %v332
      %370 = vmatprep.subr.mxu0 0.0
      %371 = vmatpush1.msra.mxu0 %v333
      %372 = vmatprep.subr.mxu0 0.0
      %373 = vmatpush1.msra.mxu0 %v334
      %374 = vmatprep.subr.mxu0 0.0
      %375 = vmatpush1.msra.mxu0 %v335
      %376 = vmatprep.subr.mxu0 0.0
      %377 = vmatpush1.msra.mxu0 %v336
      %378 = vmatprep.subr.mxu0 0.0
      %379 = vmatpush1.msra.mxu0 %v337
      %380 = vmatprep.subr.mxu0 0.0
      %381 = vmatpush1.msra.mxu0 %v338
      %382 = vmatprep.subr.mxu0 0.0
      %383 = vmatpush1.msra.mxu0 %v339
      %384 = vmatprep.subr.mxu0 0.0
      %385 = vmatpush1.msra.mxu0 %v340
      %386 = vmatprep.subr.mxu0 0.0
      %387 = vmatpush1.msra.mxu0 %v341
      %388 = vmatprep.subr.mxu0 0.0
      %389 = vmatpush1.msra.mxu0 %v342
      %390 = vmatprep.subr.mxu0 0.0
      %391 = vmatpush1.msra.mxu0 %v343
      %392 = vmatprep.subr.mxu0 0.0
      %393 = vmatpush1.msra.mxu0 %v344
      %394 = vmatprep.subr.mxu0 0.0
      %395 = vmatpush1.msra.mxu0 %v345
      %396 = vmatprep.subr.mxu0 0.0
      %397 = vmatpush1.msra.mxu0 %v346
      %398 = vmatprep.subr.mxu0 0.0
      %399 = vmatpush1.msra.mxu0 %v347
      %400 = vmatprep.subr.mxu0 0.0
      %401 = vmatpush1.msra.mxu0 %v348
      %402 = vmatprep.subr.mxu0 0.0
      %403 = vmatpush1.msra.mxu0 %v349
      %404 = vmatprep.subr.mxu0 0.0
      %405 = vmatpush1.msra.mxu0 %v350
      %406 = vmatprep.subr.mxu0 0.0
      %407 = vmatpush1.msra.mxu0 %v351
      %408 = vmatprep.subr.mxu0 0.0
      %409 = vmatpush1.msra.mxu0 %v352
      %410 = vmatprep.subr.mxu0 0.0
      %411 = vmatpush1.msra.mxu0 %v353
      %412 = vmatprep.subr.mxu0 0.0
      %413 = vmatpush1.msra.mxu0 %v354
      %414 = vmatprep.subr.mxu0 0.0
      %415 = vmatpush1.msra.mxu0 %v355
      %416 = vmatprep.subr.mxu0 0.0
      %417 = vmatpush1.msra.mxu0 %v356
      %418 = vmatprep.subr.mxu0 0.0
      %419 = vmatpush1.msra.mxu0 %v357
      %420 = vmatprep.subr.mxu0 0.0
      %421 = vmatpush1.msra.mxu0 %v358
      %422 = vmatprep.subr.mxu0 0.0
      %423 = vmatpush1.msra.mxu0 %v359
      %424 = vmatprep.mubr.f32.mxu0 %v46
      %425 = vmatmul.mubr.f32.gmra.mrb[0].mxu0 %v45
      %v426 = vpop.f32.mrb[0].mxu0
      %v427 = vadd.f32 0.0, %v426
      %v428 = vpop.f32.mrb[0].mxu0
      %429 = vmatprep.mubr.f32.mxu0 %v48
      %430 = vmatmul.mubr.f32.gmra.mrb[0].mxu0 %v47
      %v431 = vpop.f32.mrb[0].mxu0
      %v432 = vadd.f32 0.0, %v431
      %v433 = vpop.f32.mrb[0].mxu0
      %434 = vdwg.mxu0
      %v435 = vadd.f32 %v326, %v427
      %v436 = vadd.f32 %v327, %v432
      %vm437 = vcmask 64512
      %438 = vst.msk [vmem:[#allocation3] sm:$0xff] %vm437, %v435
      %439 = vst.msk [vmem:[#allocation3 + $0x8] sm:$0xff] %vm437, %v436
    $region37: #{tpu_custom_call.1} parent=1 // pred_fallthru
      _
    // Predicated region
    $region38: #{tpu_custom_call.1} parent=1 // pred_check
      %p440 = pneg %p35
    $region39: #{tpu_custom_call.1} parent=1 // pred_check_branch
      %442 = sbr.rel (%p440) target = $region41
    $region40: #{tpu_custom_call.1} parent=1 // pred_region
      %v443 = vld [vmem:[#allocation3] sm:$0xff]
      %v444 = vld [vmem:[#allocation3 + $0x8] sm:$0xff]
      %v445 = vld [vmem:[%s3] sm:$0xff]
      %v446 = vld [vmem:[%s3 + $0x8] sm:$0xff]
      %v447 = vld [vmem:[%s3 + $0x10] sm:$0xff]
      %vm448 = vcmask 64512
      %v450 = vsel %vm448, %v443, 0
      %v453 = vsel %vm448, %v444, 0
      %455 = vmatprep.subr.mxu0 %v446
      %456 = vmatpush1.msra.mxu0 %v445
      %457 = vmatprep.subr.mxu0 0.0
      %458 = vmatpush1.msra.mxu0 0.0
      %459 = vmatprep.subr.mxu0 0.0
      %460 = vmatpush1.msra.mxu0 0.0
      %461 = vmatprep.subr.mxu0 0.0
      %462 = vmatpush1.msra.mxu0 0.0
      %463 = vmatprep.subr.mxu0 0.0
      %464 = vmatpush1.msra.mxu0 0.0
      %465 = vmatprep.subr.mxu0 0.0
      %466 = vmatpush1.msra.mxu0 0.0
      %467 = vmatprep.subr.mxu0 0.0
      %468 = vmatpush1.msra.mxu0 0.0
      %469 = vmatprep.subr.mxu0 0.0
      %470 = vmatpush1.msra.mxu0 0.0
      %471 = vmatprep.subr.mxu0 0.0
      %472 = vmatpush1.msra.mxu0 0.0
      %473 = vmatprep.subr.mxu0 0.0
      %474 = vmatpush1.msra.mxu0 0.0
      %475 = vmatprep.subr.mxu0 0.0
      %476 = vmatpush1.msra.mxu0 0.0
      %477 = vmatprep.subr.mxu0 0.0
      %478 = vmatpush1.msra.mxu0 0.0
      %479 = vmatprep.subr.mxu0 0.0
      %480 = vmatpush1.msra.mxu0 0.0
      %481 = vmatprep.subr.mxu0 0.0
      %482 = vmatpush1.msra.mxu0 0.0
      %483 = vmatprep.subr.mxu0 0.0
      %484 = vmatpush1.msra.mxu0 0.0
      %485 = vmatprep.subr.mxu0 0.0
      %486 = vmatpush1.msra.mxu0 0.0
      %487 = vmatprep.subr.mxu0 0.0
      %488 = vmatpush1.msra.mxu0 0.0
      %489 = vmatprep.subr.mxu0 0.0
      %490 = vmatpush1.msra.mxu0 0.0
      %491 = vmatprep.subr.mxu0 0.0
      %492 = vmatpush1.msra.mxu0 0.0
      %493 = vmatprep.subr.mxu0 0.0
      %494 = vmatpush1.msra.mxu0 0.0
      %495 = vmatprep.subr.mxu0 0.0
      %496 = vmatpush1.msra.mxu0 0.0
      %497 = vmatprep.subr.mxu0 0.0
      %498 = vmatpush1.msra.mxu0 0.0
      %499 = vmatprep.subr.mxu0 0.0
      %500 = vmatpush1.msra.mxu0 0.0
      %501 = vmatprep.subr.mxu0 0.0
      %502 = vmatpush1.msra.mxu0 0.0
      %503 = vmatprep.subr.mxu0 0.0
      %504 = vmatpush1.msra.mxu0 0.0
      %505 = vmatprep.subr.mxu0 0.0
      %506 = vmatpush1.msra.mxu0 0.0
      %507 = vmatprep.subr.mxu0 0.0
      %508 = vmatpush1.msra.mxu0 0.0
      %509 = vmatprep.subr.mxu0 0.0
      %510 = vmatpush1.msra.mxu0 0.0
      %511 = vmatprep.subr.mxu0 0.0
      %512 = vmatpush1.msra.mxu0 0.0
      %513 = vmatprep.subr.mxu0 0.0
      %514 = vmatpush1.msra.mxu0 0.0
      %515 = vmatprep.subr.mxu0 0.0
      %516 = vmatpush1.msra.mxu0 0.0
      %517 = vmatprep.subr.mxu0 0.0
      %518 = vmatpush1.msra.mxu0 0.0
      %519 = vmatprep.mubr.f32.mxu0 0.0
      %520 = vmatmul.mubr.f32.gmra.mrb[0].mxu0 %v450
      %v521 = vpop.f32.mrb[0].mxu0
      %v522 = vadd.f32 0.0, %v521
      %v523 = vpop.f32.mrb[0].mxu0
      %v524 = vadd.f32 0.0, %v523
      %525 = vmatprep.mubr.f32.mxu0 0.0
      %526 = vmatmul.mubr.f32.gmra.mrb[0].mxu0 %v453
      %v527 = vpop.f32.mrb[0].mxu0
      %v528 = vadd.f32 0.0, %v527
      %v529 = vpop.f32.mrb[0].mxu0
      %v530 = vadd.f32 0.0, %v529
      %531 = vdwg.mxu0
      %532 = vmatprep.subr.mxu0 0.0
      %533 = vmatpush1.msra.mxu0 %v447
      %534 = vmatprep.subr.mxu0 0.0
      %535 = vmatpush1.msra.mxu0 0.0
      %536 = vmatprep.subr.mxu0 0.0
      %537 = vmatpush1.msra.mxu0 0.0
      %538 = vmatprep.subr.mxu0 0.0
      %539 = vmatpush1.msra.mxu0 0.0
      %540 = vmatprep.subr.mxu0 0.0
      %541 = vmatpush1.msra.mxu0 0.0
      %542 = vmatprep.subr.mxu0 0.0
      %543 = vmatpush1.msra.mxu0 0.0
      %544 = vmatprep.subr.mxu0 0.0
      %545 = vmatpush1.msra.mxu0 0.0
      %546 = vmatprep.subr.mxu0 0.0
      %547 = vmatpush1.msra.mxu0 0.0
      %548 = vmatprep.subr.mxu0 0.0
      %549 = vmatpush1.msra.mxu0 0.0
      %550 = vmatprep.subr.mxu0 0.0
      %551 = vmatpush1.msra.mxu0 0.0
      %552 = vmatprep.subr.mxu0 0.0
      %553 = vmatpush1.msra.mxu0 0.0
      %554 = vmatprep.subr.mxu0 0.0
      %555 = vmatpush1.msra.mxu0 0.0
      %556 = vmatprep.subr.mxu0 0.0
      %557 = vmatpush1.msra.mxu0 0.0
      %558 = vmatprep.subr.mxu0 0.0
      %559 = vmatpush1.msra.mxu0 0.0
      %560 = vmatprep.subr.mxu0 0.0
      %561 = vmatpush1.msra.mxu0 0.0
      %562 = vmatprep.subr.mxu0 0.0
      %563 = vmatpush1.msra.mxu0 0.0
      %564 = vmatprep.subr.mxu0 0.0
      %565 = vmatpush1.msra.mxu0 0.0
      %566 = vmatprep.subr.mxu0 0.0
      %567 = vmatpush1.msra.mxu0 0.0
      %568 = vmatprep.subr.mxu0 0.0
      %569 = vmatpush1.msra.mxu0 0.0
      %570 = vmatprep.subr.mxu0 0.0
      %571 = vmatpush1.msra.mxu0 0.0
      %572 = vmatprep.subr.mxu0 0.0
      %573 = vmatpush1.msra.mxu0 0.0
      %574 = vmatprep.subr.mxu0 0.0
      %575 = vmatpush1.msra.mxu0 0.0
      %576 = vmatprep.subr.mxu0 0.0
      %577 = vmatpush1.msra.mxu0 0.0
      %578 = vmatprep.subr.mxu0 0.0
      %579 = vmatpush1.msra.mxu0 0.0
      %580 = vmatprep.subr.mxu0 0.0
      %581 = vmatpush1.msra.mxu0 0.0
      %582 = vmatprep.subr.mxu0 0.0
      %583 = vmatpush1.msra.mxu0 0.0
      %584 = vmatprep.subr.mxu0 0.0
      %585 = vmatpush1.msra.mxu0 0.0
      %586 = vmatprep.subr.mxu0 0.0
      %587 = vmatpush1.msra.mxu0 0.0
      %588 = vmatprep.subr.mxu0 0.0
      %589 = vmatpush1.msra.mxu0 0.0
      %590 = vmatprep.subr.mxu0 0.0
      %591 = vmatpush1.msra.mxu0 0.0
      %592 = vmatprep.subr.mxu0 0.0
      %593 = vmatpush1.msra.mxu0 0.0
      %594 = vmatprep.subr.mxu0 0.0
      %595 = vmatpush1.msra.mxu0 0.0
      %596 = vmatprep.mubr.f32.mxu0 0.0
      %597 = vmatmul.mubr.f32.gmra.mrb[0].mxu0 %v450
      %v598 = vpop.f32.mrb[0].mxu0
      %v599 = vadd.f32 0.0, %v598
      %v600 = vpop.f32.mrb[0].mxu0
      %601 = vmatprep.mubr.f32.mxu0 0.0
      %602 = vmatmul.mubr.f32.gmra.mrb[0].mxu0 %v453
      %v603 = vpop.f32.mrb[0].mxu0
      %v604 = vadd.f32 0.0, %v603
      %v605 = vpop.f32.mrb[0].mxu0
      %606 = vdwg.mxu0
      %v607 = vld [vmem:[#allocation2] sm:$0xff]
      %v608 = vld [vmem:[#allocation2 + $0x8] sm:$0xff]
      %v609 = vld [vmem:[#allocation2 + $0x10] sm:$0xff]
      %v610 = vld [vmem:[#allocation2 + $0x18] sm:$0xff]
      %v611 = vld [vmem:[#allocation2 + $0x20] sm:$0xff]
      %v612 = vld [vmem:[#allocation2 + $0x28] sm:$0xff]
      %v613 = vadd.f32 %v607, %v522
      %v614 = vadd.f32 %v608, %v524
      %v615 = vadd.f32 %v609, %v599
      %v616 = vadd.f32 %v610, %v528
      %v617 = vadd.f32 %v611, %v530
      %v618 = vadd.f32 %v612, %v604
      %v619 = vld [vmem:[%s4] sm:$0x7]
      %v621 = vlaneseq
      %v622 = vshrl.u32 %v621, 7
      %v623 = vsub.s32 0, %v622
      %v624 = vrot.slane %v619, %v623
      %v625 = vlaneseq
      %v626 = vshrl.u32 %v625, 7
      %v627 = vsub.s32 1, %v626
      %v628 = vrot.slane %v619, %v627
      %v629 = vlaneseq
      %v630 = vshrl.u32 %v629, 7
      %v631 = vsub.s32 2, %v630
      %v632 = vrot.slane %v619, %v631
      %v636 = vadd.f32 %v613, %v624
      %v637 = vadd.f32 %v614, %v628
      %v638 = vadd.f32 %v615, %v632
      %v639 = vadd.f32 %v616, %v624
      %v640 = vadd.f32 %v617, %v628
      %v641 = vadd.f32 %v618, %v632
      %642 = vst [vmem:[#allocation7] sm:$0xff] %v636
      %643 = vst [vmem:[#allocation7 + $0x8] sm:$0xff] %v637
      %644 = vst [vmem:[#allocation7 + $0x10] sm:$0xff] %v638
      %645 = vst [vmem:[#allocation7 + $0x18] sm:$0xff] %v639
      %646 = vst [vmem:[#allocation7 + $0x20] sm:$0xff] %v640
      %647 = vst [vmem:[#allocation7 + $0x28] sm:$0xff] %v641
    $region41: #{tpu_custom_call.1} parent=1 // pred_fallthru
      _
    // Predicated region
    $region42: #{tpu_custom_call.1} parent=1 // pred_check
      _
    $region43: #{tpu_custom_call.1} parent=1 // pred_check_branch
      %649 = sbr.rel (0) target = $region45
    $region44: #{tpu_custom_call.1} parent=1 // pred_region
      %s651 = ssub.s32 768, 768
      %652 = vsyncadd [#allocation6], %s651
      %s653 = sshll.u32 [#allocation7], 4
      %s654 = int_to_ptr.vmem [resolvable:$true] %s653
      %659 = dma.vmem_to_hbm [thread:$0]  %s654, 768, %s5, [#allocation6], 384, 384, 24
    $region45: #{tpu_custom_call.1} parent=1 // pred_fallthru
      _
    // Predicated region
    $region46: #{tpu_custom_call.1} parent=1 // pred_check
      _
    $region47: #{tpu_custom_call.1} parent=1 // pred_check_branch
      %661 = sbr.rel (0) target = $region49
    $region48: #{tpu_custom_call.1} parent=1 // pred_region
      %662 = dma.done [#allocation6], 768
    $region49: #{tpu_custom_call.1} parent=1 // pred_fallthru
      _
    %663 = vsyncpa [#allocation5], 1
    %664 = vsyncpa [#allocation6], 1

</llo_original>
